<compile_context>
chip_gen: v7x
topology: tpu7x:2x2x1
jax: 0.10.0
libtpu: 0.0.40
codegen_flags: <defaults>
</compile_context>

<pallas_src>
import math

import jax
import jax.numpy as jnp
from jax.experimental import pallas as pl
from jax.experimental.pallas import tpu as pltpu


def prompt_lodim_kernel(idx_ref, m_ref, out_ref):
    """One-hot select against the prebaked folded table.

    idx_ref: (B, L*D) int32 -- indices[b, l] repeated D times along lanes
    m_ref:   (T, L*D)       -- M[t, l*D+d] = scale[d]*sum_r W[t,r]*proj[l,r,d] + bias[d]
    out_ref: (B, L*D)
    """
    T = m_ref.shape[0]
    idx = idx_ref[...]                               # (B, L*D) int32
    m = m_ref[...].astype(jnp.float32)               # single cast, hoisted out of the loop

    acc = jnp.zeros(out_ref.shape, jnp.float32)
    for t in range(T):                               # statically unrolled (T == L, tiny)
        sel = (idx == t).astype(jnp.float32)         # (B, L*D) one-hot plane, pure VPU
        acc = acc + sel * m[t:t + 1, :]              # broadcast MAC, pure VPU (no MXU)
    out_ref[...] = acc.astype(out_ref.dtype)


def fold_prompt_lodim_weights(embedding_weight, random_proj, scale, bias):
    """Setup-time (once): fold embedding table, projection, scale and bias into
    one lane-dense table M of shape (T, L*D)."""
    T, r = embedding_weight.shape
    L, _, D = random_proj.shape
    table = jnp.einsum(
        'tr,lrd->tld',
        embedding_weight.astype(jnp.float32),
        random_proj.astype(jnp.float32),
    )
    table = table * scale.astype(jnp.float32) + bias.astype(jnp.float32)
    return table.reshape(T, L * D).astype(embedding_weight.dtype)


def prompt_embedding_lodim(indices, table, *, token_dim):
    """
    indices: (B, L) int     -- values in [0, T)
    table:   (T, L*D)       -- output of fold_prompt_lodim_weights
    returns: (B, L, D)
    """
    B, L = indices.shape
    T, LD = table.shape
    D = token_dim
    assert LD == L * D

    # Pre-expand indices to the lane-dense layout: idx_exp[b, l*D + d] = indices[b, l].
    # This is the only per-call op outside the kernel (tiny broadcast of the
    # dynamic input); all static-weight algebra was folded into `table` once.
    idx_exp = jnp.repeat(indices.astype(jnp.int32), D, axis=1)       # (B, L*D)

    out_flat = pl.pallas_call(
        prompt_lodim_kernel,
        out_shape=jax.ShapeDtypeStruct((B, LD), table.dtype),
        # grid=() (single shot): whole arrays resident in VMEM, no pipeline machinery.
        in_specs=[
            pl.BlockSpec(memory_space=pltpu.MemorySpace.VMEM),       # expanded indices
            pl.BlockSpec(memory_space=pltpu.MemorySpace.VMEM),       # folded table
        ],
        out_specs=pl.BlockSpec(memory_space=pltpu.MemorySpace.VMEM),
    )(idx_exp, table)

    # Contiguous, metadata-only reshape back to the module's output layout.
    return out_flat.reshape(B, L, D)


if __name__ == "__main__":
    key = jax.random.PRNGKey(0)

    # config (small, consistent with the module)
    B = 2                        # batch
    num_virtual_tokens = 8
    num_transformer_submodules = 1
    L = num_virtual_tokens * num_transformer_submodules     # total_virtual_tokens
    r = 4                        # config.r (low dim)
    D = 32                       # token_dim
    group = 2                    # config.num_random_proj; L % group == 0

    k_emb, k_proj, k_idx, k_scale, k_bias = jax.random.split(key, 5)

    # torch.nn.Embedding default init ~ N(0, 1)
    embedding_weight = jax.random.normal(k_emb, (L, r), dtype=jnp.float32)

    # random_proj ~ U(-limit, limit) per group, expanded within each group
    limit = math.sqrt(6.0 / (r + D))
    proj_g = jax.random.uniform(k_proj, (group, r, D),
                                minval=-limit, maxval=limit, dtype=jnp.float32)
    random_proj = jnp.broadcast_to(
        proj_g[:, None, :, :], (group, L // group, r, D)).reshape(L, r, D)

    # BaseEmbedding params (module inits to ones/zeros; non-trivial values here
    # so the affine path is actually exercised by the check).
    scale = 1.0 + 0.1 * jax.random.normal(k_scale, (D,), dtype=jnp.float32)
    bias = 0.1 * jax.random.normal(k_bias, (D,), dtype=jnp.float32)

    # input indices: (B, total_virtual_tokens), values in [0, L)
    indices = jax.random.randint(k_idx, (B, L), 0, L, dtype=jnp.int32)

    # --- setup-time fold of all static weights (done once, not per forward) ---
    table = fold_prompt_lodim_weights(embedding_weight, random_proj, scale, bias)

    fwd = jax.jit(prompt_embedding_lodim, static_argnames=("token_dim",))
    out = jax.block_until_ready(fwd(indices, table, token_dim=D))

    # reference check (pure JAX, mirrors the PyTorch forward)
    emb_ref = jnp.take(embedding_weight, indices, axis=0)
    ref = jnp.einsum('blr,lrd->bld', emb_ref, random_proj) * scale + bias

    assert out.shape == (B, L, D)
    assert out.dtype == jnp.float32
    assert jnp.allclose(out, ref, atol=1e-5, rtol=1e-5), \
        float(jnp.max(jnp.abs(out - ref)))

    print("KERNEL_OK")
</pallas_src>

<mosaic_0001>
module attributes {stable_mosaic.version = 11 : i64} {
  func.func @prompt_lodim_kernel(%arg0: memref<2x256xi32, #tpu.memory_space<vmem>>, %arg1: memref<8x256xf32, #tpu.memory_space<vmem>>, %arg2: memref<2x256xf32, #tpu.memory_space<vmem>>) attributes {dimension_semantics = [], scalar_prefetch = 0 : i64, scratch_operands = 0 : i64, tpu.core_type = #tpu.core_type<tc>} {
    %c0 = arith.constant 0 : index
    %c0_0 = arith.constant 0 : index
    %0 = vector.load %arg0[%c0, %c0_0] : memref<2x256xi32, #tpu.memory_space<vmem>>, vector<2x256xi32>
    %c0_1 = arith.constant 0 : index
    %c0_2 = arith.constant 0 : index
    %1 = vector.load %arg1[%c0_1, %c0_2] : memref<8x256xf32, #tpu.memory_space<vmem>>, vector<8x256xf32>
    %cst = arith.constant 0.000000e+00 : f32
    %2 = vector.broadcast %cst : f32 to vector<2x256xf32>
    %c0_i32 = arith.constant 0 : i32
    %3 = vector.broadcast %c0_i32 : i32 to vector<2x256xi32>
    %4 = arith.cmpi eq, %0, %3 : vector<2x256xi32>
    %5 = arith.extui %4 : vector<2x256xi1> to vector<2x256xi32>
    %6 = arith.sitofp %5 : vector<2x256xi32> to vector<2x256xf32>
    %7 = vector.extract_strided_slice %1 {offsets = [0, 0], sizes = [1, 256], strides = [1, 1]} : vector<8x256xf32> to vector<1x256xf32>
    %8 = vector.broadcast %7 : vector<1x256xf32> to vector<2x256xf32>
    %9 = arith.mulf %6, %8 : vector<2x256xf32>
    %10 = arith.addf %2, %9 : vector<2x256xf32>
    %c1_i32 = arith.constant 1 : i32
    %11 = vector.broadcast %c1_i32 : i32 to vector<2x256xi32>
    %12 = arith.cmpi eq, %0, %11 : vector<2x256xi32>
    %13 = arith.extui %12 : vector<2x256xi1> to vector<2x256xi32>
    %14 = arith.sitofp %13 : vector<2x256xi32> to vector<2x256xf32>
    %15 = vector.extract_strided_slice %1 {offsets = [1, 0], sizes = [1, 256], strides = [1, 1]} : vector<8x256xf32> to vector<1x256xf32>
    %16 = vector.broadcast %15 : vector<1x256xf32> to vector<2x256xf32>
    %17 = arith.mulf %14, %16 : vector<2x256xf32>
    %18 = arith.addf %10, %17 : vector<2x256xf32>
    %c2_i32 = arith.constant 2 : i32
    %19 = vector.broadcast %c2_i32 : i32 to vector<2x256xi32>
    %20 = arith.cmpi eq, %0, %19 : vector<2x256xi32>
    %21 = arith.extui %20 : vector<2x256xi1> to vector<2x256xi32>
    %22 = arith.sitofp %21 : vector<2x256xi32> to vector<2x256xf32>
    %23 = vector.extract_strided_slice %1 {offsets = [2, 0], sizes = [1, 256], strides = [1, 1]} : vector<8x256xf32> to vector<1x256xf32>
    %24 = vector.broadcast %23 : vector<1x256xf32> to vector<2x256xf32>
    %25 = arith.mulf %22, %24 : vector<2x256xf32>
    %26 = arith.addf %18, %25 : vector<2x256xf32>
    %c3_i32 = arith.constant 3 : i32
    %27 = vector.broadcast %c3_i32 : i32 to vector<2x256xi32>
    %28 = arith.cmpi eq, %0, %27 : vector<2x256xi32>
    %29 = arith.extui %28 : vector<2x256xi1> to vector<2x256xi32>
    %30 = arith.sitofp %29 : vector<2x256xi32> to vector<2x256xf32>
    %31 = vector.extract_strided_slice %1 {offsets = [3, 0], sizes = [1, 256], strides = [1, 1]} : vector<8x256xf32> to vector<1x256xf32>
    %32 = vector.broadcast %31 : vector<1x256xf32> to vector<2x256xf32>
    %33 = arith.mulf %30, %32 : vector<2x256xf32>
    %34 = arith.addf %26, %33 : vector<2x256xf32>
    %c4_i32 = arith.constant 4 : i32
    %35 = vector.broadcast %c4_i32 : i32 to vector<2x256xi32>
    %36 = arith.cmpi eq, %0, %35 : vector<2x256xi32>
    %37 = arith.extui %36 : vector<2x256xi1> to vector<2x256xi32>
    %38 = arith.sitofp %37 : vector<2x256xi32> to vector<2x256xf32>
    %39 = vector.extract_strided_slice %1 {offsets = [4, 0], sizes = [1, 256], strides = [1, 1]} : vector<8x256xf32> to vector<1x256xf32>
    %40 = vector.broadcast %39 : vector<1x256xf32> to vector<2x256xf32>
    %41 = arith.mulf %38, %40 : vector<2x256xf32>
    %42 = arith.addf %34, %41 : vector<2x256xf32>
    %c5_i32 = arith.constant 5 : i32
    %43 = vector.broadcast %c5_i32 : i32 to vector<2x256xi32>
    %44 = arith.cmpi eq, %0, %43 : vector<2x256xi32>
    %45 = arith.extui %44 : vector<2x256xi1> to vector<2x256xi32>
    %46 = arith.sitofp %45 : vector<2x256xi32> to vector<2x256xf32>
    %47 = vector.extract_strided_slice %1 {offsets = [5, 0], sizes = [1, 256], strides = [1, 1]} : vector<8x256xf32> to vector<1x256xf32>
    %48 = vector.broadcast %47 : vector<1x256xf32> to vector<2x256xf32>
    %49 = arith.mulf %46, %48 : vector<2x256xf32>
    %50 = arith.addf %42, %49 : vector<2x256xf32>
    %c6_i32 = arith.constant 6 : i32
    %51 = vector.broadcast %c6_i32 : i32 to vector<2x256xi32>
    %52 = arith.cmpi eq, %0, %51 : vector<2x256xi32>
    %53 = arith.extui %52 : vector<2x256xi1> to vector<2x256xi32>
    %54 = arith.sitofp %53 : vector<2x256xi32> to vector<2x256xf32>
    %55 = vector.extract_strided_slice %1 {offsets = [6, 0], sizes = [1, 256], strides = [1, 1]} : vector<8x256xf32> to vector<1x256xf32>
    %56 = vector.broadcast %55 : vector<1x256xf32> to vector<2x256xf32>
    %57 = arith.mulf %54, %56 : vector<2x256xf32>
    %58 = arith.addf %50, %57 : vector<2x256xf32>
    %c7_i32 = arith.constant 7 : i32
    %59 = vector.broadcast %c7_i32 : i32 to vector<2x256xi32>
    %60 = arith.cmpi eq, %0, %59 : vector<2x256xi32>
    %61 = arith.extui %60 : vector<2x256xi1> to vector<2x256xi32>
    %62 = arith.sitofp %61 : vector<2x256xi32> to vector<2x256xf32>
    %63 = vector.extract_strided_slice %1 {offsets = [7, 0], sizes = [1, 256], strides = [1, 1]} : vector<8x256xf32> to vector<1x256xf32>
    %64 = vector.broadcast %63 : vector<1x256xf32> to vector<2x256xf32>
    %65 = arith.mulf %62, %64 : vector<2x256xf32>
    %66 = arith.addf %58, %65 : vector<2x256xf32>
    %c0_3 = arith.constant 0 : index
    %c0_4 = arith.constant 0 : index
    %67 = vector.load %arg2[%c0_3, %c0_4] : memref<2x256xf32, #tpu.memory_space<vmem>>, vector<2x256xf32>
    tpu.vector_store %arg2[%c0_3, %c0_4], %66 {strides = array<i32>} : memref<2x256xf32, #tpu.memory_space<vmem>>, vector<2x256xf32>,
    return
  }
}

</mosaic_0001>

<llo_original>
// kernel: prompt_embedding_lodim.1
$region0: #{prompt_embedding_lodim.1}
  #allocation0 [shape = 'u32[]', space=smem, size = 0x4, offset = 0x4, fixed_abs, tag = 'smem constant byte address 0x4 - core index']
  #allocation1 [shape = 'u32[144,128]{1,0:T(1,128)}', space=vmem, size = 0x12000, scoped, tag = 'internal scratch']
  %s0 = inlined_call_operand.vmem [shape: s32[2,256], index: 0, kind: input, shape index: {}]
  %s1 = inlined_call_operand.vmem [shape: f32[8,256], index: 1, kind: input, shape index: {}]
  %s2 = inlined_call_operand.vmem [shape: f32[2,256], index: 2, kind: output, shape index: {}]
  %s3 = sld [smem:[#allocation0]]
  $region18: #{prompt_embedding_lodim.1} parent=0
    _
  %s5 = ssub.s32 1, %s3
  %s6 = scalar_select 0, %s5, %s3
  // Predicated region
  $region2: #{prompt_embedding_lodim.1} parent=0 // pred_check
    _
  $region3: #{prompt_embedding_lodim.1} parent=0 // pred_check_branch
    %8 = sbr.rel (0) target = $region5
  $region4: #{prompt_embedding_lodim.1} parent=0 // pred_region
    _
  $region5: #{prompt_embedding_lodim.1} parent=0 // pred_fallthru
    _
  // Predicated region
  $region6: #{prompt_embedding_lodim.1} parent=0 // pred_check
    _
  $region7: #{prompt_embedding_lodim.1} parent=0 // pred_check_branch
    %10 = sbr.rel (0) target = $region9
  $region8: #{prompt_embedding_lodim.1} parent=0 // pred_region
    _
  $region9: #{prompt_embedding_lodim.1} parent=0 // pred_fallthru
    _
  %v11 = vld [vmem:[%s0] sm:$0xf]
  %v12 = vld [vmem:[%s1] sm:$0xff]
  %v13 = vld [vmem:[%s1 + $0x8] sm:$0xff]
  %vm14 = vcmp.eq.s32.totalorder %v11, 0
  %v15 = vsel %vm14, 1, 0
  %v16 = vcvt.s32.f32 %v15
  %v17 = vlaneseq
  %v18 = vshrl.u32 %v17, 7
  %v19 = vsub.s32 0, %v18
  %v20 = vrot.slane %v12, %v19
  %v21 = vlaneseq
  %v22 = vshrl.u32 %v21, 7
  %v23 = vsub.s32 0, %v22
  %v24 = vrot.slane %v13, %v23
  %v27 = vcombine.low %v20, %v24
  %v29 = vunpack.c.l.s4 1983009808
  %v30 = vunpack.c.0.s8 %v29
  %v31 = vlaneseq
  %v32 = vshrl.u32 %v31, 7
  %v33 = vsub.s32 %v30, %v32
  %v34 = vrot.slane %v27, %v33
  %v36 = vmul.f32 %v16, %v34
  %v37 = vadd.f32 %v36, 0.0
  %vm38 = vcmp.eq.s32.totalorder %v11, 1
  %v39 = vsel %vm38, 1, 0
  %v40 = vcvt.s32.f32 %v39
  %v41 = vlaneseq
  %v42 = vshrl.u32 %v41, 7
  %v43 = vsub.s32 1, %v42
  %v44 = vrot.slane %v12, %v43
  %v45 = vlaneseq
  %v46 = vshrl.u32 %v45, 7
  %v47 = vsub.s32 1, %v46
  %v48 = vrot.slane %v13, %v47
  %v51 = vcombine.low %v44, %v48
  %v53 = vunpack.c.l.s4 1983009808
  %v54 = vunpack.c.0.s8 %v53
  %v55 = vlaneseq
  %v56 = vshrl.u32 %v55, 7
  %v57 = vsub.s32 %v54, %v56
  %v58 = vrot.slane %v51, %v57
  %v60 = vmul.f32 %v40, %v58
  %v61 = vadd.f32 %v37, %v60
  %vm62 = vcmp.eq.s32.totalorder %v11, 2
  %v63 = vsel %vm62, 1, 0
  %v64 = vcvt.s32.f32 %v63
  %v65 = vlaneseq
  %v66 = vshrl.u32 %v65, 7
  %v67 = vsub.s32 2, %v66
  %v68 = vrot.slane %v12, %v67
  %v69 = vlaneseq
  %v70 = vshrl.u32 %v69, 7
  %v71 = vsub.s32 2, %v70
  %v72 = vrot.slane %v13, %v71
  %v75 = vcombine.low %v68, %v72
  %v77 = vunpack.c.l.s4 1983009808
  %v78 = vunpack.c.0.s8 %v77
  %v79 = vlaneseq
  %v80 = vshrl.u32 %v79, 7
  %v81 = vsub.s32 %v78, %v80
  %v82 = vrot.slane %v75, %v81
  %v84 = vmul.f32 %v64, %v82
  %v85 = vadd.f32 %v61, %v84
  %vm86 = vcmp.eq.s32.totalorder %v11, 3
  %v87 = vsel %vm86, 1, 0
  %v88 = vcvt.s32.f32 %v87
  %v89 = vlaneseq
  %v90 = vshrl.u32 %v89, 7
  %v91 = vsub.s32 3, %v90
  %v92 = vrot.slane %v12, %v91
  %v93 = vlaneseq
  %v94 = vshrl.u32 %v93, 7
  %v95 = vsub.s32 3, %v94
  %v96 = vrot.slane %v13, %v95
  %v99 = vcombine.low %v92, %v96
  %v101 = vunpack.c.l.s4 1983009808
  %v102 = vunpack.c.0.s8 %v101
  %v103 = vlaneseq
  %v104 = vshrl.u32 %v103, 7
  %v105 = vsub.s32 %v102, %v104
  %v106 = vrot.slane %v99, %v105
  %v108 = vmul.f32 %v88, %v106
  %v109 = vadd.f32 %v85, %v108
  %vm110 = vcmp.eq.s32.totalorder %v11, 4
  %v111 = vsel %vm110, 1, 0
  %v112 = vcvt.s32.f32 %v111
  %v113 = vlaneseq
  %v114 = vshrl.u32 %v113, 7
  %v115 = vsub.s32 4, %v114
  %v116 = vrot.slane %v12, %v115
  %v117 = vlaneseq
  %v118 = vshrl.u32 %v117, 7
  %v119 = vsub.s32 4, %v118
  %v120 = vrot.slane %v13, %v119
  %v123 = vcombine.low %v116, %v120
  %v125 = vunpack.c.l.s4 1983009808
  %v126 = vunpack.c.0.s8 %v125
  %v127 = vlaneseq
  %v128 = vshrl.u32 %v127, 7
  %v129 = vsub.s32 %v126, %v128
  %v130 = vrot.slane %v123, %v129
  %v132 = vmul.f32 %v112, %v130
  %v133 = vadd.f32 %v109, %v132
  %vm134 = vcmp.eq.s32.totalorder %v11, 5
  %v135 = vsel %vm134, 1, 0
  %v136 = vcvt.s32.f32 %v135
  %v137 = vlaneseq
  %v138 = vshrl.u32 %v137, 7
  %v139 = vsub.s32 5, %v138
  %v140 = vrot.slane %v12, %v139
  %v141 = vlaneseq
  %v142 = vshrl.u32 %v141, 7
  %v143 = vsub.s32 5, %v142
  %v144 = vrot.slane %v13, %v143
  %v147 = vcombine.low %v140, %v144
  %v149 = vunpack.c.l.s4 1983009808
  %v150 = vunpack.c.0.s8 %v149
  %v151 = vlaneseq
  %v152 = vshrl.u32 %v151, 7
  %v153 = vsub.s32 %v150, %v152
  %v154 = vrot.slane %v147, %v153
  %v156 = vmul.f32 %v136, %v154
  %v157 = vadd.f32 %v133, %v156
  %vm158 = vcmp.eq.s32.totalorder %v11, 6
  %v159 = vsel %vm158, 1, 0
  %v160 = vcvt.s32.f32 %v159
  %v161 = vlaneseq
  %v162 = vshrl.u32 %v161, 7
  %v163 = vsub.s32 6, %v162
  %v164 = vrot.slane %v12, %v163
  %v165 = vlaneseq
  %v166 = vshrl.u32 %v165, 7
  %v167 = vsub.s32 6, %v166
  %v168 = vrot.slane %v13, %v167
  %v171 = vcombine.low %v164, %v168
  %v173 = vunpack.c.l.s4 1983009808
  %v174 = vunpack.c.0.s8 %v173
  %v175 = vlaneseq
  %v176 = vshrl.u32 %v175, 7
  %v177 = vsub.s32 %v174, %v176
  %v178 = vrot.slane %v171, %v177
  %v180 = vmul.f32 %v160, %v178
  %v181 = vadd.f32 %v157, %v180
  %vm182 = vcmp.eq.s32.totalorder %v11, 7
  %v183 = vsel %vm182, 1, 0
  %v184 = vcvt.s32.f32 %v183
  %v185 = vlaneseq
  %v186 = vshrl.u32 %v185, 7
  %v187 = vsub.s32 7, %v186
  %v188 = vrot.slane %v12, %v187
  %v189 = vlaneseq
  %v190 = vshrl.u32 %v189, 7
  %v191 = vsub.s32 7, %v190
  %v192 = vrot.slane %v13, %v191
  %v195 = vcombine.low %v188, %v192
  %v197 = vunpack.c.l.s4 1983009808
  %v198 = vunpack.c.0.s8 %v197
  %v199 = vlaneseq
  %v200 = vshrl.u32 %v199, 7
  %v201 = vsub.s32 %v198, %v200
  %v202 = vrot.slane %v195, %v201
  %v204 = vmul.f32 %v184, %v202
  %v205 = vadd.f32 %v181, %v204
  %206 = vst [vmem:[%s2] sm:$0xf] %v205
  // Predicated region
  $region10: #{prompt_embedding_lodim.1} parent=0 // pred_check
    _
  $region11: #{prompt_embedding_lodim.1} parent=0 // pred_check_branch
    %208 = sbr.rel (0) target = $region13
  $region12: #{prompt_embedding_lodim.1} parent=0 // pred_region
    _
  $region13: #{prompt_embedding_lodim.1} parent=0 // pred_fallthru
    _
  // Predicated region
  $region14: #{prompt_embedding_lodim.1} parent=0 // pred_check
    _
  $region15: #{prompt_embedding_lodim.1} parent=0 // pred_check_branch
    %210 = sbr.rel (0) target = $region17
  $region16: #{prompt_embedding_lodim.1} parent=0 // pred_region
    _
  $region17: #{prompt_embedding_lodim.1} parent=0 // pred_fallthru
    _

</llo_original>
